<compile_context>
chip_gen: v6e
topology: v6e:2x2x1
jax: 0.10.0
libtpu: 0.0.40
codegen_flags: <defaults>
</compile_context>

<pallas_src>
import jax
import jax.numpy as jnp
from jax.experimental import pallas as pl
from jax.experimental.pallas import tpu as pltpu


def _rmsnorm_kernel(x_ref, scale_ref, o_ref, *, eps: float):
    # x_ref: (tm, H) in the input dtype; scale_ref: (1, H) float32 (pre-cast).
    x_f32 = x_ref[...].astype(jnp.float32)
    # Mean of squares along the normalized (last / lane) axis, in float32 — this
    # matches the PyTorch module's x.to(float32).pow(2).mean(dim=-1).
    norm_x = jnp.mean(x_f32 * x_f32, axis=-1, keepdims=True)     # (tm, 1)
    inv_rms = jax.lax.rsqrt(norm_x + eps)                        # (tm, 1)
    x_normed = x_f32 * inv_rms                                   # (tm, H) f32
    o_ref[...] = (scale_ref[...] * x_normed).astype(o_ref.dtype)


def _vmem_capacity_bytes() -> int:
    try:
        return int(pltpu.get_tpu_info().vmem_capacity_bytes)
    except Exception:
        # Conservative fallback: v7x has the smallest VMEM (64 MiB per core).
        return 64 << 20


def _choose_row_tile(rows: int, hidden: int, itemsize: int, vmem_cap: int) -> int:
    """Largest row tile that keeps 2x(in)+2x(out) double-buffered blocks in VMEM."""
    if rows <= 8:
        return rows
    row_bytes = hidden * itemsize
    # Budget ~1/3 of physical VMEM for the 4 double-buffered blocks; the rest is
    # headroom for compiler scratch / vregs.
    budget = vmem_cap // 3
    tm = budget // max(4 * row_bytes, 1)
    tm = max(8, (tm // 8) * 8)
    tm = min(tm, 8192)
    if tm >= rows:
        return rows  # single block; block_shape equals full array dims -> legal
    # Keep >= ~8 grid steps (pipelining / v7x megacore) but never shrink blocks
    # below ~2 MiB (the measured ~85%-of-roofline knee).
    min_tm = max(8, (((2 << 20) // max(row_bytes, 1)) // 8) * 8)
    steps_cap = max(8, ((rows // 8) // 8) * 8)
    tm = min(tm, max(min_tm, steps_cap))
    return max(8, tm)


def rmsnorm(x: jax.Array, scale: jax.Array, eps: float = 1e-5) -> jax.Array:
    """RMSNorm over the last axis of x. scale has shape (hidden,)."""
    orig_shape = x.shape
    hidden = orig_shape[-1]
    rows = 1
    for d in orig_shape[:-1]:
        rows *= d

    x2d = x.reshape(rows, hidden)
    # Hoist the scale cast out of the kernel body: cast once here, keep resident
    # in VMEM via the constant (0, 0) index_map.
    scale2d = scale.reshape(1, hidden).astype(jnp.float32)

    itemsize = jnp.dtype(x.dtype).itemsize
    vmem_cap = _vmem_capacity_bytes()
    tm = _choose_row_tile(rows, hidden, itemsize, vmem_cap)
    grid = (pl.cdiv(rows, tm),)

    block_bytes = tm * hidden * itemsize
    vmem_limit = int(min(int(vmem_cap * 0.9),
                         max(32 << 20, 4 * block_bytes + (8 << 20))))

    out = pl.pallas_call(
        lambda x_ref, s_ref, o_ref: _rmsnorm_kernel(x_ref, s_ref, o_ref, eps=eps),
        out_shape=jax.ShapeDtypeStruct((rows, hidden), x.dtype),
        grid_spec=pltpu.PrefetchScalarGridSpec(
            num_scalar_prefetch=0,
            grid=grid,
            in_specs=[
                pl.BlockSpec((tm, hidden), lambda i: (i, 0)),
                pl.BlockSpec((1, hidden), lambda i: (0, 0)),
            ],
            out_specs=pl.BlockSpec((tm, hidden), lambda i: (i, 0)),
        ),
        compiler_params=pltpu.CompilerParams(
            dimension_semantics=("parallel",),
            vmem_limit_bytes=vmem_limit,
        ),
    )(x2d, scale2d)

    return out.reshape(orig_shape)


if __name__ == "__main__":
    # Small shapes implied by the module: a (batch, seq, hidden) activation.
    batch, seq, hidden = 2, 8, 32
    key = jax.random.PRNGKey(0)
    x = jax.random.normal(key, (batch, seq, hidden), dtype=jnp.float32)

    # Deterministic parameter init: nn.Parameter(torch.ones(size)) -> ones.
    scale = jnp.ones((hidden,), dtype=jnp.float32)

    out = rmsnorm(x, scale, eps=1e-5)
    out = jax.block_until_ready(out)

    # Reference check in plain JAX (mirrors the PyTorch forward exactly).
    norm_x = jnp.mean(x.astype(jnp.float32) ** 2, axis=-1, keepdims=True)
    ref = (scale * (x * jax.lax.rsqrt(norm_x + 1e-5))).astype(x.dtype)
    assert jnp.allclose(out, ref, atol=1e-5, rtol=1e-5), "mismatch vs reference"

    print("KERNEL_OK")
</pallas_src>

<mosaic_0001>
module attributes {stable_mosaic.version = 11 : i64} {
  func.func @_lambda_(%arg0: i32, %arg1: memref<16x32xf32, #tpu.memory_space<vmem>>, %arg2: memref<1x32xf32, #tpu.memory_space<vmem>>, %arg3: memref<16x32xf32, #tpu.memory_space<vmem>>) attributes {dimension_semantics = [#tpu.dimension_semantics<parallel>], iteration_bounds = array<i64: 1>, scalar_prefetch = 0 : i64, scratch_operands = 0 : i64, tpu.core_type = #tpu.core_type<tc>, window_params = [{transform_indices = @transform_0, window_bounds = array<i64: 16, 32>}, {pipeline_mode = #tpu.pipeline_mode<synchronous>, transform_indices = @transform_1, window_bounds = array<i64: 1, 32>}, {transform_indices = @transform_2, window_bounds = array<i64: 16, 32>}]} {
    %c0 = arith.constant 0 : index
    %c0_0 = arith.constant 0 : index
    %0 = vector.load %arg1[%c0, %c0_0] : memref<16x32xf32, #tpu.memory_space<vmem>>, vector<16x32xf32>
    %1 = arith.mulf %0, %0 : vector<16x32xf32>
    %cst = arith.constant dense<0.000000e+00> : vector<16xf32>
    %2 = vector.multi_reduction <add>, %1, %cst [1] : vector<16x32xf32> to vector<16xf32>
    %3 = vector.shape_cast %2 : vector<16xf32> to vector<16x1xf32>
    %cst_1 = arith.constant 3.200000e+01 : f32
    %4 = vector.broadcast %cst_1 : f32 to vector<16x1xf32>
    %5 = arith.divf %3, %4 : vector<16x1xf32>
    %cst_2 = arith.constant 9.99999974E-6 : f32
    %6 = vector.broadcast %cst_2 : f32 to vector<16x1xf32>
    %7 = arith.addf %5, %6 : vector<16x1xf32>
    %8 = math.rsqrt %7 : vector<16x1xf32>
    %9 = vector.broadcast %8 : vector<16x1xf32> to vector<16x32xf32>
    %10 = arith.mulf %0, %9 : vector<16x32xf32>
    %c0_3 = arith.constant 0 : index
    %c0_4 = arith.constant 0 : index
    %11 = vector.load %arg2[%c0_3, %c0_4] : memref<1x32xf32, #tpu.memory_space<vmem>>, vector<1x32xf32>
    %12 = vector.broadcast %11 : vector<1x32xf32> to vector<16x32xf32>
    %13 = arith.mulf %12, %10 : vector<16x32xf32>
    %c0_5 = arith.constant 0 : index
    %c0_6 = arith.constant 0 : index
    %14 = vector.load %arg3[%c0_5, %c0_6] : memref<16x32xf32, #tpu.memory_space<vmem>>, vector<16x32xf32>
    tpu.vector_store %arg3[%c0_5, %c0_6], %13 {strides = array<i32>} : memref<16x32xf32, #tpu.memory_space<vmem>>, vector<16x32xf32>,
    return
  }
  func.func @transform_0(%arg0: i32) -> (i32, i32) {
    %c0_i32 = arith.constant 0 : i32
    %c0_i32_0 = arith.constant 0 : i32
    return %arg0, %c0_i32 : i32, i32
  }
  func.func @transform_1(%arg0: i32) -> (i32, i32) {
    %c0_i32 = arith.constant 0 : i32
    %c0_i32_0 = arith.constant 0 : i32
    %c0_i32_1 = arith.constant 0 : i32
    return %c0_i32, %c0_i32_0 : i32, i32
  }
  func.func @transform_2(%arg0: i32) -> (i32, i32) {
    %c0_i32 = arith.constant 0 : i32
    %c0_i32_0 = arith.constant 0 : i32
    return %arg0, %c0_i32 : i32, i32
  }
}

</mosaic_0001>

<llo_original>
// kernel: tpu_custom_call.1
$region0: #{tpu_custom_call.1}
  #allocation0 [shape = 'u32[]', space=smem, size = 0x4, offset = 0x4, fixed_abs, tag = 'smem constant byte address 0x4 - core index']
  #allocation1 [shape = 'u32[144,128]{1,0:T(1,128)}', space=vmem, size = 0x12000, scoped, tag = 'internal scratch']
  %s0 = inlined_call_operand.hbm [shape: f32[16,32], index: 0, kind: input, shape index: {}]
  %s1 = inlined_call_operand.vmem [shape: f32[1,32], index: 1, kind: input, shape index: {}]
  %s2 = inlined_call_operand.hbm [shape: f32[16,32], index: 2, kind: output, shape index: {}]
  %s3 = sld [smem:[#allocation0]]
  $region22: #{tpu_custom_call.1} parent=0
    _
  %s5 = ssub.s32 1, %s3
  %s6 = scalar_select 0, %s5, %s3
  $region1: #{tpu_custom_call.1} parent=0
    #allocation2 [shape = 'u8[8192]{0}', space=vmem, size = 0x2000, scoped, tag = 'input window, operand 0, single buffered']
    #allocation3 [shape = 's32[1]{0}', space=sflag, size = 0x4, scoped, tag = 'scoped memory for tpu_custom_call.1']
    #allocation4 [shape = 's32[1]{0}', space=sflag, size = 0x4, scoped, tag = 'scoped memory for tpu_custom_call.1']
    #allocation5 [shape = 'u8[8192]{0}', space=vmem, size = 0x2000, scoped, tag = 'output window, operand 0, single buffered']
    %7 = vsyncpa [#allocation3], 0
    %8 = vsyncpa [#allocation4], 0
    // Predicated region
    $region2: #{tpu_custom_call.1} parent=1 // pred_check
      _
    $region3: #{tpu_custom_call.1} parent=1 // pred_check_branch
      %10 = sbr.rel (0) target = $region5
    $region4: #{tpu_custom_call.1} parent=1 // pred_region
      %s12 = ssub.s32 256, 256
      %13 = vsyncadd [#allocation3], %s12
      %s14 = sshll.u32 [#allocation2], 4
      %s15 = int_to_ptr.vmem [resolvable:$true] %s14
      %20 = dma.hbm_to_vmem [thread:$0]  %s0, 256, %s15, [#allocation3], 128, 128, 8
    $region5: #{tpu_custom_call.1} parent=1 // pred_fallthru
      _
    // Predicated region
    $region6: #{tpu_custom_call.1} parent=1 // pred_check
      _
    $region7: #{tpu_custom_call.1} parent=1 // pred_check_branch
      %22 = sbr.rel (0) target = $region9
    $region8: #{tpu_custom_call.1} parent=1 // pred_region
      _
    $region9: #{tpu_custom_call.1} parent=1 // pred_fallthru
      _
    // Predicated region
    $region10: #{tpu_custom_call.1} parent=1 // pred_check
      _
    $region11: #{tpu_custom_call.1} parent=1 // pred_check_branch
      %24 = sbr.rel (0) target = $region13
    $region12: #{tpu_custom_call.1} parent=1 // pred_region
      %25 = dma.done [#allocation3], 256
    $region13: #{tpu_custom_call.1} parent=1 // pred_fallthru
      _
    %v26 = vld [vmem:[#allocation2] sm:$0xff]
    %v27 = vld [vmem:[#allocation2 + $0x8] sm:$0xff]
    %v28 = vmul.f32 %v26, %v26
    %v29 = vmul.f32 %v27, %v27
    %vm30 = vcmask 261120
    %v31 = vsel %vm30, %v28, 0.0
    %32 = vadd.xlane.f32.xlu0 %v31
    %v33 = vpop.xlane.xlu0 %32
    %v34 = vsel %vm30, %v29, 0.0
    %35 = vadd.xlane.f32.xlu0 %v34
    %v36 = vpop.xlane.xlu0 %35
    %v37 = vrcp.pop 32.0
    %v38 = vmul.f32 %v33, %v37
    %v39 = vmul.f32 %v36, %v37
    %v40 = vadd.f32 %v38, 1e-05
    %v41 = vadd.f32 %v39, 1e-05
    %v42 = vrsqrt.pop %v40
    %v43 = vrsqrt.pop %v41
    %v44 = vmul.f32 %v26, %v42
    %v45 = vmul.f32 %v27, %v43
    %v46 = vld [vmem:[%s1] sm:$0x1]
    %v48 = vlaneseq
    %v49 = vshrl.u32 %v48, 7
    %v50 = vsub.s32 0, %v49
    %v51 = vrot.slane %v46, %v50
    %v53 = vmul.f32 %v51, %v44
    %v54 = vmul.f32 %v51, %v45
    %55 = vst.msk [vmem:[#allocation5] sm:$0xff] %vm30, %v53
    %56 = vst.msk [vmem:[#allocation5 + $0x8] sm:$0xff] %vm30, %v54
    // Predicated region
    $region14: #{tpu_custom_call.1} parent=1 // pred_check
      _
    $region15: #{tpu_custom_call.1} parent=1 // pred_check_branch
      %58 = sbr.rel (0) target = $region17
    $region16: #{tpu_custom_call.1} parent=1 // pred_region
      %s60 = ssub.s32 256, 256
      %61 = vsyncadd [#allocation4], %s60
      %s62 = sshll.u32 [#allocation5], 4
      %s63 = int_to_ptr.vmem [resolvable:$true] %s62
      %68 = dma.vmem_to_hbm [thread:$0]  %s63, 256, %s2, [#allocation4], 128, 128, 8
    $region17: #{tpu_custom_call.1} parent=1 // pred_fallthru
      _
    // Predicated region
    $region18: #{tpu_custom_call.1} parent=1 // pred_check
      _
    $region19: #{tpu_custom_call.1} parent=1 // pred_check_branch
      %70 = sbr.rel (0) target = $region21
    $region20: #{tpu_custom_call.1} parent=1 // pred_region
      %71 = dma.done [#allocation4], 256
    $region21: #{tpu_custom_call.1} parent=1 // pred_fallthru
      _
    %72 = vsyncpa [#allocation3], 1
    %73 = vsyncpa [#allocation4], 1

</llo_original>
